<compile_context>
chip_gen: v6e
topology: v6e:2x2x1
jax: 0.10.0
libtpu: 0.0.40
codegen_flags: <defaults>
</compile_context>

<pallas_src>
import functools

import numpy as np
import jax
import jax.numpy as jnp
from jax.experimental import pallas as pl
from jax.experimental.pallas import tpu as pltpu


# ----------------------------- Pallas kernels ------------------------------

def _dsconv_kernel(taps_ref, w_ref, b_ref, o_ref, *, apply_relu):
    """One fused depthwise-separable conv tile.

    taps_ref : (K*K*Cin, TM)  im2col patches, M on lanes
    w_ref    : (Cout, K*K*Cin) depthwise+pointwise+BN-scale folded weight
    b_ref    : (Cout, 1)       folded BN bias
    o_ref    : (Cout, TM)      lane-dense output tile
    """
    y = jnp.dot(w_ref[...], taps_ref[...], preferred_element_type=jnp.float32)
    y = y + b_ref[...]
    if apply_relu:
        y = jnp.maximum(y, 0.0)
    o_ref[...] = y


def _dsconv_residual_kernel(*refs, has_proj):
    """conv2 tile fused with residual (1x1 projection or identity) + ReLU."""
    if has_proj:
        taps_ref, w_ref, b_ref, res_ref, wr_ref, o_ref = refs
    else:
        taps_ref, w_ref, b_ref, res_ref, o_ref = refs
    y = jnp.dot(w_ref[...], taps_ref[...],
                preferred_element_type=jnp.float32) + b_ref[...]
    if has_proj:
        r = jnp.dot(wr_ref[...], res_ref[...],
                    preferred_element_type=jnp.float32)
    else:
        r = res_ref[...]
    o_ref[...] = jnp.maximum(y + r, 0.0)


# --------------------------- pallas_call wrappers ---------------------------

def _mosaic_params():
    # 32 MiB fits the default scoped-VMEM budget on v5e/v6e/v7x; tiles below
    # are sized well under it.
    return pltpu.CompilerParams(
        dimension_semantics=("parallel",),
        vmem_limit_bytes=32 * 1024 * 1024,
    )


def _round_up(a, b):
    return -(-a // b) * b


def _choose_tm(m, bytes_per_lane, max_tm=2048, vmem_budget=8 * 1024 * 1024):
    """Largest M tile (multiple of 128, <= max_tm) whose double-buffered
    streamed operands fit in `vmem_budget` bytes."""
    m128 = _round_up(m, 128)
    fit = (vmem_budget // (2 * bytes_per_lane)) // 128 * 128
    tm = max(128, min(max_tm, fit))
    return min(tm, m128)


def _pad_lanes(a, m_pad):
    return jnp.pad(a, ((0, 0), (0, m_pad - a.shape[1])))


def _dsconv_call(taps, wfold, bias, tm, *, apply_relu):
    kc, m_pad = taps.shape
    cout = wfold.shape[0]
    return pl.pallas_call(
        functools.partial(_dsconv_kernel, apply_relu=apply_relu),
        out_shape=jax.ShapeDtypeStruct((cout, m_pad), jnp.float32),
        grid=(m_pad // tm,),
        in_specs=[
            pl.BlockSpec((kc, tm), lambda i: (0, i)),       # streamed taps
            pl.BlockSpec((cout, kc), lambda i: (0, 0)),     # resident weight
            pl.BlockSpec((cout, 1), lambda i: (0, 0)),      # resident bias
        ],
        out_specs=pl.BlockSpec((cout, tm), lambda i: (0, i)),
        compiler_params=_mosaic_params(),
    )(taps, wfold, bias)


def _dsconv_residual_call(taps, wfold, bias, res, wr, tm):
    kc, m_pad = taps.shape
    cout = wfold.shape[0]
    cr = res.shape[0]
    has_proj = wr is not None
    in_specs = [
        pl.BlockSpec((kc, tm), lambda i: (0, i)),           # streamed taps
        pl.BlockSpec((cout, kc), lambda i: (0, 0)),         # resident weight
        pl.BlockSpec((cout, 1), lambda i: (0, 0)),          # resident bias
        pl.BlockSpec((cr, tm), lambda i: (0, i)),           # streamed residual
    ]
    args = [taps, wfold, bias, res]
    if has_proj:
        in_specs.append(pl.BlockSpec((cout, wr.shape[1]), lambda i: (0, 0)))
        args.append(wr)
    return pl.pallas_call(
        functools.partial(_dsconv_residual_kernel, has_proj=has_proj),
        out_shape=jax.ShapeDtypeStruct((cout, m_pad), jnp.float32),
        grid=(m_pad // tm,),
        in_specs=in_specs,
        out_specs=pl.BlockSpec((cout, tm), lambda i: (0, i)),
        compiler_params=_mosaic_params(),
    )(*args)


# ------------------------------- glue (JAX) --------------------------------

def _im2col_cm(x_nchw, ksize, stride):
    """Zero-pad and gather the K*K strided taps into channels-major layout.

    Returns (K*K*C, M) with row index = t*C + c (t = kh*K + kw) and
    column index m = (n*OH + oh)*OW + ow, plus (OH, OW).
    """
    n, c, h, w = x_nchw.shape
    p = ksize // 2
    xp = jnp.pad(x_nchw, ((0, 0), (0, 0), (p, p), (p, p)))
    oh = (h + 2 * p - ksize) // stride + 1
    ow = (w + 2 * p - ksize) // stride + 1
    cols = []
    for kh in range(ksize):
        for kw in range(ksize):
            t = jax.lax.slice(
                xp, (0, 0, kh, kw),
                (n, c, kh + (oh - 1) * stride + 1, kw + (ow - 1) * stride + 1),
                (1, 1, stride, stride))                       # (N, C, OH, OW)
            cols.append(jnp.transpose(t, (1, 0, 2, 3)).reshape(c, n * oh * ow))
    return jnp.concatenate(cols, axis=0), (oh, ow)


def _fold_weights(dw, pw, scale):
    """Fold depthwise (K*K, Cin), pointwise (Cin, Cout) and BN scale (Cout,)
    into a single (Cout, K*K*Cin) MXU weight."""
    kk, c = dw.shape
    cout = pw.shape[1]
    w = (dw[:, :, None] * pw[None, :, :]).reshape(kk * c, cout)
    return w.T * scale[:, None]


def forward(params, x_nchw, *, ksize, stride):
    x = x_nchw.astype(jnp.float32)
    n, cin, _, _ = x.shape
    cout = params["pw1"].shape[1]
    kk = ksize * ksize
    center = (ksize // 2) * ksize + (ksize // 2)

    # ---- conv1: depthwise(stride) + pointwise + BN + ReLU (tuple flag True)
    taps1, (oh, ow) = _im2col_cm(x, ksize, stride)            # (K*K*Cin, M)
    m = n * oh * ow
    # centre tap == x[:, :, ::stride, ::stride] in CM layout -> residual input
    res_cm = taps1[center * cin:(center + 1) * cin, :]        # (Cin, M)

    w1 = _fold_weights(params["dw1"], params["pw1"], params["s1"])
    b1 = params["b1"].reshape(cout, 1)
    tm1 = _choose_tm(m, bytes_per_lane=4 * (kk * cin + cout))
    mp1 = _round_up(m, tm1)
    y1 = _dsconv_call(_pad_lanes(taps1, mp1), w1, b1, tm1,
                      apply_relu=True)[:, :m]                 # (Cout, M)

    # ---- conv2: depthwise(1) + pointwise + BN (flag False), fused with
    # ----        residual projection / identity add + final ReLU
    y1_nchw = jnp.transpose(y1.reshape(cout, n, oh, ow), (1, 0, 2, 3))
    taps2, _ = _im2col_cm(y1_nchw, ksize, 1)                  # (K*K*Cout, M)
    w2 = _fold_weights(params["dw2"], params["pw2"], params["s2"])
    b2 = params["b2"].reshape(cout, 1)

    has_proj = params["w1x1"] is not None
    wr = params["w1x1"].T if has_proj else None               # (Cout, Cin)
    cr = cin if has_proj else cout
    tm2 = _choose_tm(m, bytes_per_lane=4 * (kk * cout + cr + cout))
    mp2 = _round_up(m, tm2)
    out = _dsconv_residual_call(
        _pad_lanes(taps2, mp2), w2, b2, _pad_lanes(res_cm, mp2), wr,
        tm2)[:, :m]                                           # (Cout, M)

    return jnp.transpose(out.reshape(cout, n, oh, ow), (1, 0, 2, 3))  # NCHW


def init_params(key, cin, cout, ksize, stride, batch_norm=True):
    ks = jax.random.split(key, 13)
    kk = ksize * ksize
    eps = 1e-5

    def bn_fold(kg, kb, km, kv, ch):
        if not batch_norm:
            return jnp.ones((ch,), jnp.float32), jnp.zeros((ch,), jnp.float32)
        gamma = 1.0 + 0.1 * jax.random.normal(kg, (ch,), jnp.float32)
        beta = 0.1 * jax.random.normal(kb, (ch,), jnp.float32)
        mean = 0.1 * jax.random.normal(km, (ch,), jnp.float32)
        var = 1.0 + 0.5 * jnp.abs(jax.random.normal(kv, (ch,), jnp.float32))
        scale = gamma / jnp.sqrt(var + eps)
        bias = beta - mean * scale
        return scale, bias

    s1, b1 = bn_fold(ks[2], ks[3], ks[4], ks[5], cout)
    s2, b2 = bn_fold(ks[8], ks[9], ks[10], ks[11], cout)
    return {
        "dw1": 0.3 * jax.random.normal(ks[0], (kk, cin), jnp.float32),
        "pw1": 0.3 * jax.random.normal(ks[1], (cin, cout), jnp.float32),
        "s1": s1, "b1": b1,
        "dw2": 0.3 * jax.random.normal(ks[6], (kk, cout), jnp.float32),
        "pw2": 0.3 * jax.random.normal(ks[7], (cout, cout), jnp.float32),
        "s2": s2, "b2": b2,
        "w1x1": (0.3 * jax.random.normal(ks[12], (cin, cout), jnp.float32)
                 if (cin != cout or stride != 1) else None),
    }


# ------------------------- pure-JAX reference check ------------------------

def reference_forward(x_nchw, p, ksize, stride):
    x = jnp.transpose(x_nchw, (0, 2, 3, 1)).astype(jnp.float32)
    pad = ksize // 2
    k = ksize
    hp = jax.lax.Precision.HIGHEST

    def ds_conv(h, dw_flat, pw, scale, bias, s, relu):
        c = h.shape[-1]
        dw = dw_flat.reshape(k, k, 1, c)
        h = jax.lax.conv_general_dilated(
            h, dw, (s, s), [(pad, pad), (pad, pad)], feature_group_count=c,
            dimension_numbers=("NHWC", "HWIO", "NHWC"), precision=hp)
        h = jax.lax.conv_general_dilated(
            h, pw.reshape(1, 1, *pw.shape), (1, 1), [(0, 0), (0, 0)],
            dimension_numbers=("NHWC", "HWIO", "NHWC"), precision=hp)
        h = h * scale.reshape(1, 1, 1, -1) + bias.reshape(1, 1, 1, -1)
        return jnp.maximum(h, 0.0) if relu else h

    out = ds_conv(x, p["dw1"], p["pw1"], p["s1"], p["b1"], stride, True)
    out = ds_conv(out, p["dw2"], p["pw2"], p["s2"], p["b2"], 1, False)
    if p["w1x1"] is not None:
        res = jax.lax.conv_general_dilated(
            x, p["w1x1"].reshape(1, 1, *p["w1x1"].shape), (stride, stride),
            [(0, 0), (0, 0)], dimension_numbers=("NHWC", "HWIO", "NHWC"),
            precision=hp)
    else:
        res = x
    return jnp.transpose(jnp.maximum(out + res, 0.0), (0, 3, 1, 2))


# ----------------------------------- main -----------------------------------

if __name__ == "__main__":
    N, CIN, COUT, H, W, K, STRIDE = 2, 4, 8, 16, 16, 3, 2
    key = jax.random.PRNGKey(0)
    kx, kp = jax.random.split(key)
    x = jax.random.normal(kx, (N, CIN, H, W), jnp.float32)
    params = init_params(kp, CIN, COUT, K, STRIDE)

    fwd = jax.jit(functools.partial(forward, ksize=K, stride=STRIDE))
    out = jax.block_until_ready(fwd(params, x))

    ref = jax.block_until_ready(reference_forward(x, params, K, STRIDE))

    assert out.shape == ref.shape == (N, COUT, H // STRIDE, W // STRIDE), out.shape
    if not np.allclose(np.asarray(out), np.asarray(ref), rtol=1e-2, atol=1e-2):
        raise AssertionError(
            "mismatch, max abs err = "
            f"{float(np.max(np.abs(np.asarray(out) - np.asarray(ref))))}")
    print("KERNEL_OK")
</pallas_src>

<mosaic_0001>
module attributes {stable_mosaic.version = 11 : i64} {
  func.func @_dsconv_kernel(%arg0: i32, %arg1: memref<36x128xf32, #tpu.memory_space<vmem>>, %arg2: memref<8x36xf32, #tpu.memory_space<vmem>>, %arg3: memref<8x1xf32, #tpu.memory_space<vmem>>, %arg4: memref<8x128xf32, #tpu.memory_space<vmem>>) attributes {dimension_semantics = [#tpu.dimension_semantics<parallel>], iteration_bounds = array<i64: 1>, scalar_prefetch = 0 : i64, scratch_operands = 0 : i64, tpu.core_type = #tpu.core_type<tc>, window_params = [{transform_indices = @transform_0, window_bounds = array<i64: 36, 128>}, {pipeline_mode = #tpu.pipeline_mode<synchronous>, transform_indices = @transform_1, window_bounds = array<i64: 8, 36>}, {pipeline_mode = #tpu.pipeline_mode<synchronous>, transform_indices = @transform_2, window_bounds = array<i64: 8, 1>}, {transform_indices = @transform_3, window_bounds = array<i64: 8, 128>}]} {
    %c0 = arith.constant 0 : index
    %c0_0 = arith.constant 0 : index
    %0 = vector.load %arg2[%c0, %c0_0] : memref<8x36xf32, #tpu.memory_space<vmem>>, vector<8x36xf32>
    %c0_1 = arith.constant 0 : index
    %c0_2 = arith.constant 0 : index
    %1 = vector.load %arg1[%c0_1, %c0_2] : memref<36x128xf32, #tpu.memory_space<vmem>>, vector<36x128xf32>
    %cst = arith.constant dense<0.000000e+00> : vector<8x128xf32>
    %2 = tpu.matmul %0, %1, %cst {dimension_numbers = #tpu.dot_dimension_numbers<[1], [0], [0], [1], [0, 0, 1, 1], [], []>} : vector<8x36xf32>, vector<36x128xf32>, vector<8x128xf32> -> vector<8x128xf32>
    %c0_3 = arith.constant 0 : index
    %c0_4 = arith.constant 0 : index
    %3 = vector.load %arg3[%c0_3, %c0_4] : memref<8x1xf32, #tpu.memory_space<vmem>>, vector<8x1xf32>
    %4 = vector.broadcast %3 : vector<8x1xf32> to vector<8x128xf32>
    %5 = arith.addf %2, %4 : vector<8x128xf32>
    %cst_5 = arith.constant 0.000000e+00 : f32
    %6 = vector.broadcast %cst_5 : f32 to vector<8x128xf32>
    %7 = arith.maximumf %5, %6 : vector<8x128xf32>
    %c0_6 = arith.constant 0 : index
    %c0_7 = arith.constant 0 : index
    %8 = vector.load %arg4[%c0_6, %c0_7] : memref<8x128xf32, #tpu.memory_space<vmem>>, vector<8x128xf32>
    tpu.vector_store %arg4[%c0_6, %c0_7], %7 {strides = array<i32>} : memref<8x128xf32, #tpu.memory_space<vmem>>, vector<8x128xf32>,
    return
  }
  func.func @transform_0(%arg0: i32) -> (i32, i32) {
    %c0_i32 = arith.constant 0 : i32
    %c0_i32_0 = arith.constant 0 : i32
    return %c0_i32, %arg0 : i32, i32
  }
  func.func @transform_1(%arg0: i32) -> (i32, i32) {
    %c0_i32 = arith.constant 0 : i32
    %c0_i32_0 = arith.constant 0 : i32
    %c0_i32_1 = arith.constant 0 : i32
    return %c0_i32, %c0_i32_0 : i32, i32
  }
  func.func @transform_2(%arg0: i32) -> (i32, i32) {
    %c0_i32 = arith.constant 0 : i32
    %c0_i32_0 = arith.constant 0 : i32
    %c0_i32_1 = arith.constant 0 : i32
    return %c0_i32, %c0_i32_0 : i32, i32
  }
  func.func @transform_3(%arg0: i32) -> (i32, i32) {
    %c0_i32 = arith.constant 0 : i32
    %c0_i32_0 = arith.constant 0 : i32
    return %c0_i32, %arg0 : i32, i32
  }
}

module attributes {stable_mosaic.version = 11 : i64} {
  func.func @_dsconv_residual_kernel(%arg0: i32, %arg1: memref<72x128xf32, #tpu.memory_space<vmem>>, %arg2: memref<8x72xf32, #tpu.memory_space<vmem>>, %arg3: memref<8x1xf32, #tpu.memory_space<vmem>>, %arg4: memref<4x128xf32, #tpu.memory_space<vmem>>, %arg5: memref<8x4xf32, #tpu.memory_space<vmem>>, %arg6: memref<8x128xf32, #tpu.memory_space<vmem>>) attributes {dimension_semantics = [#tpu.dimension_semantics<parallel>], iteration_bounds = array<i64: 1>, scalar_prefetch = 0 : i64, scratch_operands = 0 : i64, tpu.core_type = #tpu.core_type<tc>, window_params = [{transform_indices = @transform_0, window_bounds = array<i64: 72, 128>}, {pipeline_mode = #tpu.pipeline_mode<synchronous>, transform_indices = @transform_1, window_bounds = array<i64: 8, 72>}, {pipeline_mode = #tpu.pipeline_mode<synchronous>, transform_indices = @transform_2, window_bounds = array<i64: 8, 1>}, {transform_indices = @transform_3, window_bounds = array<i64: 4, 128>}, {pipeline_mode = #tpu.pipeline_mode<synchronous>, transform_indices = @transform_4, window_bounds = array<i64: 8, 4>}, {transform_indices = @transform_5, window_bounds = array<i64: 8, 128>}]} {
    %c0 = arith.constant 0 : index
    %c0_0 = arith.constant 0 : index
    %0 = vector.load %arg2[%c0, %c0_0] : memref<8x72xf32, #tpu.memory_space<vmem>>, vector<8x72xf32>
    %c0_1 = arith.constant 0 : index
    %c0_2 = arith.constant 0 : index
    %1 = vector.load %arg1[%c0_1, %c0_2] : memref<72x128xf32, #tpu.memory_space<vmem>>, vector<72x128xf32>
    %cst = arith.constant dense<0.000000e+00> : vector<8x128xf32>
    %2 = tpu.matmul %0, %1, %cst {dimension_numbers = #tpu.dot_dimension_numbers<[1], [0], [0], [1], [0, 0, 1, 1], [], []>} : vector<8x72xf32>, vector<72x128xf32>, vector<8x128xf32> -> vector<8x128xf32>
    %c0_3 = arith.constant 0 : index
    %c0_4 = arith.constant 0 : index
    %3 = vector.load %arg3[%c0_3, %c0_4] : memref<8x1xf32, #tpu.memory_space<vmem>>, vector<8x1xf32>
    %4 = vector.broadcast %3 : vector<8x1xf32> to vector<8x128xf32>
    %5 = arith.addf %2, %4 : vector<8x128xf32>
    %c0_5 = arith.constant 0 : index
    %c0_6 = arith.constant 0 : index
    %6 = vector.load %arg5[%c0_5, %c0_6] : memref<8x4xf32, #tpu.memory_space<vmem>>, vector<8x4xf32>
    %c0_7 = arith.constant 0 : index
    %c0_8 = arith.constant 0 : index
    %7 = vector.load %arg4[%c0_7, %c0_8] : memref<4x128xf32, #tpu.memory_space<vmem>>, vector<4x128xf32>
    %cst_9 = arith.constant dense<0.000000e+00> : vector<8x128xf32>
    %8 = tpu.matmul %6, %7, %cst_9 {dimension_numbers = #tpu.dot_dimension_numbers<[1], [0], [0], [1], [0, 0, 1, 1], [], []>} : vector<8x4xf32>, vector<4x128xf32>, vector<8x128xf32> -> vector<8x128xf32>
    %9 = arith.addf %5, %8 : vector<8x128xf32>
    %cst_10 = arith.constant 0.000000e+00 : f32
    %10 = vector.broadcast %cst_10 : f32 to vector<8x128xf32>
    %11 = arith.maximumf %9, %10 : vector<8x128xf32>
    %c0_11 = arith.constant 0 : index
    %c0_12 = arith.constant 0 : index
    %12 = vector.load %arg6[%c0_11, %c0_12] : memref<8x128xf32, #tpu.memory_space<vmem>>, vector<8x128xf32>
    tpu.vector_store %arg6[%c0_11, %c0_12], %11 {strides = array<i32>} : memref<8x128xf32, #tpu.memory_space<vmem>>, vector<8x128xf32>,
    return
  }
  func.func @transform_0(%arg0: i32) -> (i32, i32) {
    %c0_i32 = arith.constant 0 : i32
    %c0_i32_0 = arith.constant 0 : i32
    return %c0_i32, %arg0 : i32, i32
  }
  func.func @transform_1(%arg0: i32) -> (i32, i32) {
    %c0_i32 = arith.constant 0 : i32
    %c0_i32_0 = arith.constant 0 : i32
    %c0_i32_1 = arith.constant 0 : i32
    return %c0_i32, %c0_i32_0 : i32, i32
  }
  func.func @transform_2(%arg0: i32) -> (i32, i32) {
    %c0_i32 = arith.constant 0 : i32
    %c0_i32_0 = arith.constant 0 : i32
    %c0_i32_1 = arith.constant 0 : i32
    return %c0_i32, %c0_i32_0 : i32, i32
  }
  func.func @transform_3(%arg0: i32) -> (i32, i32) {
    %c0_i32 = arith.constant 0 : i32
    %c0_i32_0 = arith.constant 0 : i32
    return %c0_i32, %arg0 : i32, i32
  }
  func.func @transform_4(%arg0: i32) -> (i32, i32) {
    %c0_i32 = arith.constant 0 : i32
    %c0_i32_0 = arith.constant 0 : i32
    %c0_i32_1 = arith.constant 0 : i32
    return %c0_i32, %c0_i32_0 : i32, i32
  }
  func.func @transform_5(%arg0: i32) -> (i32, i32) {
    %c0_i32 = arith.constant 0 : i32
    %c0_i32_0 = arith.constant 0 : i32
    return %c0_i32, %arg0 : i32, i32
  }
}

</mosaic_0001>

<llo_original>
// kernel: forward.2
$region0: #{forward.2}
  #allocation0 [shape = 'u32[]', space=smem, size = 0x4, offset = 0x4, fixed_abs, tag = 'smem constant byte address 0x4 - core index']
  #allocation1 [shape = 'u32[144,128]{1,0:T(1,128)}', space=vmem, size = 0x12000, scoped, tag = 'internal scratch']
  %s0 = inlined_call_operand.vmem [shape: f32[36,128], index: 0, kind: input, shape index: {}]
  %s1 = inlined_call_operand.vmem [shape: f32[8,36], index: 1, kind: input, shape index: {}]
  %s2 = inlined_call_operand.vmem [shape: f32[8,1], index: 2, kind: input, shape index: {}]
  %s3 = inlined_call_operand.vmem [shape: f32[8,128], index: 3, kind: output, shape index: {}]
  %s4 = sld [smem:[#allocation0]]
  $region22: #{forward.2} parent=0
    _
  %s6 = ssub.s32 1, %s4
  %s7 = scalar_select 0, %s6, %s4
  // Predicated region
  $region2: #{forward.2} parent=0 // pred_check
    _
  $region3: #{forward.2} parent=0 // pred_check_branch
    %9 = sbr.rel (0) target = $region5
  $region4: #{forward.2} parent=0 // pred_region
    _
  $region5: #{forward.2} parent=0 // pred_fallthru
    _
  // Predicated region
  $region6: #{forward.2} parent=0 // pred_check
    _
  $region7: #{forward.2} parent=0 // pred_check_branch
    %11 = sbr.rel (0) target = $region9
  $region8: #{forward.2} parent=0 // pred_region
    _
  $region9: #{forward.2} parent=0 // pred_fallthru
    _
  // Predicated region
  $region10: #{forward.2} parent=0 // pred_check
    _
  $region11: #{forward.2} parent=0 // pred_check_branch
    %13 = sbr.rel (0) target = $region13
  $region12: #{forward.2} parent=0 // pred_region
    _
  $region13: #{forward.2} parent=0 // pred_fallthru
    _
  %v14 = vld [vmem:[%s1] sm:$0xff]
  %v15 = vld [vmem:[%s0] sm:$0xff]
  %v16 = vld [vmem:[%s0 + $0x8] sm:$0xff]
  %v17 = vld [vmem:[%s0 + $0x10] sm:$0xff]
  %v18 = vld [vmem:[%s0 + $0x18] sm:$0xff]
  %v19 = vld [vmem:[%s0 + $0x20] sm:$0xf]
  %v20 = vld [vmem:[%s2] sm:$0xff]
  %22 = vset.pattern.permute.xlu0 0
  %23 = vperm.xlu0 %22, %v20
  %v24 = vpop.permute.xlu0 %23
  %vm26 = vcmask 293888
  %v28 = vsel %vm26, %v14, 0
  %vm30 = vcmask 1043456
  %v32 = vsel %vm30, %v19, 0
  %34 = vmatprep.subr.mxu0 0.0
  %35 = vmatpush1.msra.mxu0 0.0
  %36 = vmatprep.subr.mxu0 0.0
  %37 = vmatpush1.msra.mxu0 0.0
  %38 = vmatprep.subr.mxu0 0.0
  %39 = vmatpush1.msra.mxu0 0.0
  %40 = vmatprep.subr.mxu0 0.0
  %41 = vmatpush1.msra.mxu0 0.0
  %42 = vmatprep.subr.mxu0 0.0
  %43 = vmatpush1.msra.mxu0 0.0
  %44 = vmatprep.subr.mxu0 0.0
  %45 = vmatpush1.msra.mxu0 0.0
  %46 = vmatprep.subr.mxu0 0.0
  %47 = vmatpush1.msra.mxu0 0.0
  %48 = vmatprep.subr.mxu0 0.0
  %49 = vmatpush1.msra.mxu0 0.0
  %50 = vmatprep.subr.mxu0 0.0
  %51 = vmatpush1.msra.mxu0 0.0
  %52 = vmatprep.subr.mxu0 0.0
  %53 = vmatpush1.msra.mxu0 0.0
  %54 = vmatprep.subr.mxu0 0.0
  %55 = vmatpush1.msra.mxu0 0.0
  %56 = vmatprep.subr.mxu0 0.0
  %57 = vmatpush1.msra.mxu0 %v32
  %58 = vmatprep.subr.mxu0 0.0
  %59 = vmatpush1.msra.mxu0 %v18
  %60 = vmatprep.subr.mxu0 0.0
  %61 = vmatpush1.msra.mxu0 %v17
  %62 = vmatprep.subr.mxu0 0.0
  %63 = vmatpush1.msra.mxu0 %v16
  %64 = vmatprep.subr.mxu0 0.0
  %65 = vmatpush1.msra.mxu0 %v15
  %66 = vmatprep.subr.mxu0 0.0
  %67 = vmatpush2.msra.mxu0 0.0
  %68 = vmatprep.subr.mxu0 0.0
  %69 = vmatpush2.msra.mxu0 0.0
  %70 = vmatprep.subr.mxu0 0.0
  %71 = vmatpush2.msra.mxu0 0.0
  %72 = vmatprep.subr.mxu0 0.0
  %73 = vmatpush2.msra.mxu0 0.0
  %74 = vmatprep.subr.mxu0 0.0
  %75 = vmatpush2.msra.mxu0 0.0
  %76 = vmatprep.subr.mxu0 0.0
  %77 = vmatpush2.msra.mxu0 0.0
  %78 = vmatprep.subr.mxu0 0.0
  %79 = vmatpush2.msra.mxu0 0.0
  %80 = vmatprep.subr.mxu0 0.0
  %81 = vmatpush2.msra.mxu0 0.0
  %82 = vmatprep.subr.mxu0 0.0
  %83 = vmatpush2.msra.mxu0 0.0
  %84 = vmatprep.subr.mxu0 0.0
  %85 = vmatpush2.msra.mxu0 0.0
  %86 = vmatprep.subr.mxu0 0.0
  %87 = vmatpush2.msra.mxu0 0.0
  %88 = vmatprep.subr.mxu0 0.0
  %89 = vmatpush2.msra.mxu0 0.0
  %90 = vmatprep.subr.mxu0 0.0
  %91 = vmatpush2.msra.mxu0 0.0
  %92 = vmatprep.subr.mxu0 0.0
  %93 = vmatpush2.msra.mxu0 0.0
  %94 = vmatprep.subr.mxu0 0.0
  %95 = vmatpush2.msra.mxu0 0.0
  %96 = vmatprep.subr.mxu0 0.0
  %97 = vmatpush2.msra.mxu0 0.0
  %98 = vmatprep.mubr.f32.mxu0 0.0
  %99 = vmatmul.mubr.f32.gmra.mxu0 %v28
  %v100 = vpop.f32.mrf.mxu0
  %v101 = vadd.f32 %v24, %v100
  %v102 = vpop.f32.mrf.mxu0
  %103 = vdwg.mxu0
  %v104 = vmax.f32 %v101, 0.0
  %105 = vst [vmem:[%s3] sm:$0xff] %v104
  // Predicated region
  $region14: #{forward.2} parent=0 // pred_check
    _
  $region15: #{forward.2} parent=0 // pred_check_branch
    %107 = sbr.rel (0) target = $region17
  $region16: #{forward.2} parent=0 // pred_region
    _
  $region17: #{forward.2} parent=0 // pred_fallthru
    _
  // Predicated region
  $region18: #{forward.2} parent=0 // pred_check
    _
  $region19: #{forward.2} parent=0 // pred_check_branch
    %109 = sbr.rel (0) target = $region21
  $region20: #{forward.2} parent=0 // pred_region
    _
  $region21: #{forward.2} parent=0 // pred_fallthru
    _

// kernel: forward.3
$region0: #{forward.3}
  #allocation0 [shape = 'u32[]', space=smem, size = 0x4, offset = 0x4, fixed_abs, tag = 'smem constant byte address 0x4 - core index']
  #allocation1 [shape = 'u32[144,128]{1,0:T(1,128)}', space=vmem, size = 0x12000, scoped, tag = 'internal scratch']
  %s0 = inlined_call_operand.vmem [shape: f32[72,128], index: 0, kind: input, shape index: {}]
  %s1 = inlined_call_operand.vmem [shape: f32[8,72], index: 1, kind: input, shape index: {}]
  %s2 = inlined_call_operand.vmem [shape: f32[8,1], index: 2, kind: input, shape index: {}]
  %s3 = inlined_call_operand.vmem [shape: f32[4,128], index: 3, kind: input, shape index: {}]
  %s4 = inlined_call_operand.vmem [shape: f32[8,4], index: 4, kind: input, shape index: {}]
  %s5 = inlined_call_operand.vmem [shape: f32[8,128], index: 5, kind: output, shape index: {}]
  %s6 = sld [smem:[#allocation0]]
  $region30: #{forward.3} parent=0
    _
  %s8 = ssub.s32 1, %s6
  %s9 = scalar_select 0, %s8, %s6
  // Predicated region
  $region2: #{forward.3} parent=0 // pred_check
    _
  $region3: #{forward.3} parent=0 // pred_check_branch
    %11 = sbr.rel (0) target = $region5
  $region4: #{forward.3} parent=0 // pred_region
    _
  $region5: #{forward.3} parent=0 // pred_fallthru
    _
  // Predicated region
  $region6: #{forward.3} parent=0 // pred_check
    _
  $region7: #{forward.3} parent=0 // pred_check_branch
    %13 = sbr.rel (0) target = $region9
  $region8: #{forward.3} parent=0 // pred_region
    _
  $region9: #{forward.3} parent=0 // pred_fallthru
    _
  // Predicated region
  $region10: #{forward.3} parent=0 // pred_check
    _
  $region11: #{forward.3} parent=0 // pred_check_branch
    %15 = sbr.rel (0) target = $region13
  $region12: #{forward.3} parent=0 // pred_region
    _
  $region13: #{forward.3} parent=0 // pred_fallthru
    _
  // Predicated region
  $region14: #{forward.3} parent=0 // pred_check
    _
  $region15: #{forward.3} parent=0 // pred_check_branch
    %17 = sbr.rel (0) target = $region17
  $region16: #{forward.3} parent=0 // pred_region
    _
  $region17: #{forward.3} parent=0 // pred_fallthru
    _
  // Predicated region
  $region18: #{forward.3} parent=0 // pred_check
    _
  $region19: #{forward.3} parent=0 // pred_check_branch
    %19 = sbr.rel (0) target = $region21
  $region20: #{forward.3} parent=0 // pred_region
    _
  $region21: #{forward.3} parent=0 // pred_fallthru
    _
  %v20 = vld [vmem:[%s1] sm:$0xff]
  %v21 = vld [vmem:[%s0] sm:$0xff]
  %v22 = vld [vmem:[%s0 + $0x8] sm:$0xff]
  %v23 = vld [vmem:[%s0 + $0x10] sm:$0xff]
  %v24 = vld [vmem:[%s0 + $0x18] sm:$0xff]
  %v25 = vld [vmem:[%s0 + $0x20] sm:$0xff]
  %v26 = vld [vmem:[%s0 + $0x28] sm:$0xff]
  %v27 = vld [vmem:[%s0 + $0x30] sm:$0xff]
  %v28 = vld [vmem:[%s0 + $0x38] sm:$0xff]
  %v29 = vld [vmem:[%s0 + $0x40] sm:$0xff]
  %v30 = vld [vmem:[%s2] sm:$0xff]
  %32 = vset.pattern.permute.xlu0 0
  %33 = vperm.xlu0 %32, %v30
  %v34 = vpop.permute.xlu0 %33
  %vm36 = vcmask 588800
  %v38 = vsel %vm36, %v20, 0
  %40 = vmatprep.subr.mxu0 0.0
  %41 = vmatpush1.msra.mxu0 0.0
  %42 = vmatprep.subr.mxu0 0.0
  %43 = vmatpush1.msra.mxu0 0.0
  %44 = vmatprep.subr.mxu0 0.0
  %45 = vmatpush1.msra.mxu0 0.0
  %46 = vmatprep.subr.mxu0 0.0
  %47 = vmatpush1.msra.mxu0 0.0
  %48 = vmatprep.subr.mxu0 0.0
  %49 = vmatpush1.msra.mxu0 0.0
  %50 = vmatprep.subr.mxu0 0.0
  %51 = vmatpush1.msra.mxu0 0.0
  %52 = vmatprep.subr.mxu0 0.0
  %53 = vmatpush1.msra.mxu0 0.0
  %54 = vmatprep.subr.mxu0 0.0
  %55 = vmatpush1.msra.mxu0 %v29
  %56 = vmatprep.subr.mxu0 0.0
  %57 = vmatpush1.msra.mxu0 %v28
  %58 = vmatprep.subr.mxu0 0.0
  %59 = vmatpush1.msra.mxu0 %v27
  %60 = vmatprep.subr.mxu0 0.0
  %61 = vmatpush1.msra.mxu0 %v26
  %62 = vmatprep.subr.mxu0 0.0
  %63 = vmatpush1.msra.mxu0 %v25
  %64 = vmatprep.subr.mxu0 0.0
  %65 = vmatpush1.msra.mxu0 %v24
  %66 = vmatprep.subr.mxu0 0.0
  %67 = vmatpush1.msra.mxu0 %v23
  %68 = vmatprep.subr.mxu0 0.0
  %69 = vmatpush1.msra.mxu0 %v22
  %70 = vmatprep.subr.mxu0 0.0
  %71 = vmatpush1.msra.mxu0 %v21
  %72 = vmatprep.subr.mxu0 0.0
  %73 = vmatpush2.msra.mxu0 0.0
  %74 = vmatprep.subr.mxu0 0.0
  %75 = vmatpush2.msra.mxu0 0.0
  %76 = vmatprep.subr.mxu0 0.0
  %77 = vmatpush2.msra.mxu0 0.0
  %78 = vmatprep.subr.mxu0 0.0
  %79 = vmatpush2.msra.mxu0 0.0
  %80 = vmatprep.subr.mxu0 0.0
  %81 = vmatpush2.msra.mxu0 0.0
  %82 = vmatprep.subr.mxu0 0.0
  %83 = vmatpush2.msra.mxu0 0.0
  %84 = vmatprep.subr.mxu0 0.0
  %85 = vmatpush2.msra.mxu0 0.0
  %86 = vmatprep.subr.mxu0 0.0
  %87 = vmatpush2.msra.mxu0 0.0
  %88 = vmatprep.subr.mxu0 0.0
  %89 = vmatpush2.msra.mxu0 0.0
  %90 = vmatprep.subr.mxu0 0.0
  %91 = vmatpush2.msra.mxu0 0.0
  %92 = vmatprep.subr.mxu0 0.0
  %93 = vmatpush2.msra.mxu0 0.0
  %94 = vmatprep.subr.mxu0 0.0
  %95 = vmatpush2.msra.mxu0 0.0
  %96 = vmatprep.subr.mxu0 0.0
  %97 = vmatpush2.msra.mxu0 0.0
  %98 = vmatprep.subr.mxu0 0.0
  %99 = vmatpush2.msra.mxu0 0.0
  %100 = vmatprep.subr.mxu0 0.0
  %101 = vmatpush2.msra.mxu0 0.0
  %102 = vmatprep.subr.mxu0 0.0
  %103 = vmatpush2.msra.mxu0 0.0
  %104 = vmatprep.mubr.f32.mxu0 0.0
  %105 = vmatmul.mubr.f32.gmra.mxu0 %v38
  %v106 = vpop.f32.mrf.mxu0
  %v107 = vadd.f32 %v34, %v106
  %v108 = vpop.f32.mrf.mxu0
  %109 = vdwg.mxu0
  %v110 = vld [vmem:[%s4] sm:$0xff]
  %v111 = vld [vmem:[%s3] sm:$0xf]
  %vm112 = vcmask 31744
  %v114 = vsel %vm112, %v110, 0
  %vm116 = vcmask 1043456
  %v118 = vsel %vm116, %v111, 0
  %120 = vmatprep.subr.mxu0 0.0
  %121 = vmatpush1.msra.mxu0 0.0
  %122 = vmatprep.subr.mxu0 0.0
  %123 = vmatpush1.msra.mxu0 0.0
  %124 = vmatprep.subr.mxu0 0.0
  %125 = vmatpush1.msra.mxu0 0.0
  %126 = vmatprep.subr.mxu0 0.0
  %127 = vmatpush1.msra.mxu0 0.0
  %128 = vmatprep.subr.mxu0 0.0
  %129 = vmatpush1.msra.mxu0 0.0
  %130 = vmatprep.subr.mxu0 0.0
  %131 = vmatpush1.msra.mxu0 0.0
  %132 = vmatprep.subr.mxu0 0.0
  %133 = vmatpush1.msra.mxu0 0.0
  %134 = vmatprep.subr.mxu0 0.0
  %135 = vmatpush1.msra.mxu0 0.0
  %136 = vmatprep.subr.mxu0 0.0
  %137 = vmatpush1.msra.mxu0 0.0
  %138 = vmatprep.subr.mxu0 0.0
  %139 = vmatpush1.msra.mxu0 0.0
  %140 = vmatprep.subr.mxu0 0.0
  %141 = vmatpush1.msra.mxu0 0.0
  %142 = vmatprep.subr.mxu0 0.0
  %143 = vmatpush1.msra.mxu0 0.0
  %144 = vmatprep.subr.mxu0 0.0
  %145 = vmatpush1.msra.mxu0 0.0
  %146 = vmatprep.subr.mxu0 0.0
  %147 = vmatpush1.msra.mxu0 0.0
  %148 = vmatprep.subr.mxu0 0.0
  %149 = vmatpush1.msra.mxu0 0.0
  %150 = vmatprep.subr.mxu0 0.0
  %151 = vmatpush1.msra.mxu0 %v118
  %152 = vmatprep.subr.mxu0 0.0
  %153 = vmatpush2.msra.mxu0 0.0
  %154 = vmatprep.subr.mxu0 0.0
  %155 = vmatpush2.msra.mxu0 0.0
  %156 = vmatprep.subr.mxu0 0.0
  %157 = vmatpush2.msra.mxu0 0.0
  %158 = vmatprep.subr.mxu0 0.0
  %159 = vmatpush2.msra.mxu0 0.0
  %160 = vmatprep.subr.mxu0 0.0
  %161 = vmatpush2.msra.mxu0 0.0
  %162 = vmatprep.subr.mxu0 0.0
  %163 = vmatpush2.msra.mxu0 0.0
  %164 = vmatprep.subr.mxu0 0.0
  %165 = vmatpush2.msra.mxu0 0.0
  %166 = vmatprep.subr.mxu0 0.0
  %167 = vmatpush2.msra.mxu0 0.0
  %168 = vmatprep.subr.mxu0 0.0
  %169 = vmatpush2.msra.mxu0 0.0
  %170 = vmatprep.subr.mxu0 0.0
  %171 = vmatpush2.msra.mxu0 0.0
  %172 = vmatprep.subr.mxu0 0.0
  %173 = vmatpush2.msra.mxu0 0.0
  %174 = vmatprep.subr.mxu0 0.0
  %175 = vmatpush2.msra.mxu0 0.0
  %176 = vmatprep.subr.mxu0 0.0
  %177 = vmatpush2.msra.mxu0 0.0
  %178 = vmatprep.subr.mxu0 0.0
  %179 = vmatpush2.msra.mxu0 0.0
  %180 = vmatprep.subr.mxu0 0.0
  %181 = vmatpush2.msra.mxu0 0.0
  %182 = vmatprep.subr.mxu0 0.0
  %183 = vmatpush2.msra.mxu0 0.0
  %184 = vmatprep.mubr.f32.mxu0 0.0
  %185 = vmatmul.mubr.f32.gmra.mxu0 %v114
  %v186 = vpop.f32.mrf.mxu0
  %v187 = vadd.f32 0.0, %v186
  %v188 = vpop.f32.mrf.mxu0
  %189 = vdwg.mxu0
  %v190 = vadd.f32 %v107, %v187
  %v191 = vmax.f32 %v190, 0.0
  %192 = vst [vmem:[%s5] sm:$0xff] %v191
  // Predicated region
  $region22: #{forward.3} parent=0 // pred_check
    _
  $region23: #{forward.3} parent=0 // pred_check_branch
    %194 = sbr.rel (0) target = $region25
  $region24: #{forward.3} parent=0 // pred_region
    _
  $region25: #{forward.3} parent=0 // pred_fallthru
    _
  // Predicated region
  $region26: #{forward.3} parent=0 // pred_check
    _
  $region27: #{forward.3} parent=0 // pred_check_branch
    %196 = sbr.rel (0) target = $region29
  $region28: #{forward.3} parent=0 // pred_region
    _
  $region29: #{forward.3} parent=0 // pred_fallthru
    _

</llo_original>
